<compile_context>
chip_gen: v7x
topology: tpu7x:2x2x1
jax: 0.10.0
libtpu: 0.0.40
codegen_flags: <defaults>
</compile_context>

<pallas_src>
import functools

import jax
import jax.numpy as jnp
from jax import lax
from jax.experimental import pallas as pl
from jax.experimental.pallas import tpu as pltpu

_LANES = 128


def _focal_loss_kernel(x_ref, t_ref, out_ref, *, gamma, alpha_vals, n_classes,
                       hw, rows_tile, needs_mask):
    """One (batch-block, row-tile) step: writes the partial loss sum (scalar).

    x_ref : (nb, C, R, 128)  logits (any float dtype)
    t_ref : (nb, R, 128)     int32 targets
    out_ref: (1, 1, 1, 1)    f32 partial sum for this grid point
    """
    j = pl.program_id(1)

    x = x_ref[...].astype(jnp.float32)        # (nb, C, R, 128)
    t = t_ref[...]                            # (nb, R, 128)

    if n_classes == 2:
        # Fast path: logpt = -softplus(x_other - x_target), stable form.
        x0 = x[:, 0]
        x1 = x[:, 1]
        sel1 = (t == 1)
        x_t = jnp.where(sel1, x1, x0)
        x_o = jnp.where(sel1, x0, x1)
        d = x_t - x_o                                        # logit margin
        e = jnp.exp(-jnp.abs(d))                             # EUP exp, e in (0, 1]
        logpt = -(jnp.maximum(-d, 0.0) + jnp.log(1.0 + e))   # EUP log
        pt = jnp.exp(logpt)                                  # EUP exp
    else:
        # General path: stable log-softmax across the C dense planes
        # (axis=1 is a major axis -> elementwise VPU maxes/adds, no XLU).
        m = jnp.max(x, axis=1)                               # (nb, R, 128)
        s = jnp.zeros_like(m)
        for c in range(n_classes):
            s = s + jnp.exp(x[:, c] - m)
        lse = jnp.log(s)
        x_t = x[:, 0]
        for c in range(1, n_classes):                        # static select chain
            x_t = jnp.where(t == c, x[:, c], x_t)
        logpt = (x_t - m) - lse
        pt = jnp.exp(logpt)

    # at = alpha[target]; alpha is a compile-time table -> chain of VPU selects.
    at = jnp.full(t.shape, alpha_vals[0], dtype=jnp.float32)
    for idx in range(1, min(n_classes, len(alpha_vals))):
        at = jnp.where(t == idx, jnp.float32(alpha_vals[idx]), at)

    one_minus_pt = jnp.maximum(1.0 - pt, 0.0)
    if float(gamma) == int(gamma) and gamma >= 0:
        focal = lax.integer_pow(one_minus_pt, int(gamma))    # gamma=2 -> one mul
    else:
        focal = one_minus_pt ** jnp.float32(gamma)

    loss = -(focal * at) * logpt                             # (nb, R, 128)

    if needs_mask:
        last = pl.num_programs(1) - 1

        @pl.when(j == last)
        def _():
            # Mask padded lanes / out-of-bounds rows BEFORE the reduce.
            row = lax.broadcasted_iota(jnp.int32, loss.shape, loss.ndim - 2)
            lane = lax.broadcasted_iota(jnp.int32, loss.shape, loss.ndim - 1)
            flat = (j * rows_tile + row) * _LANES + lane
            masked = jnp.where(flat < hw, loss, 0.0)
            out_ref[...] = jnp.sum(masked).reshape(1, 1, 1, 1)

        @pl.when(j != last)
        def _():
            out_ref[...] = jnp.sum(loss).reshape(1, 1, 1, 1)
    else:
        out_ref[...] = jnp.sum(loss).reshape(1, 1, 1, 1)


def focal_loss(x_nchw, target_nhw, *, gamma=2.0, alpha=0.25,
               size_average=True, per_step_bytes=4 << 20):
    """Focal loss forward.

    x_nchw:     (N, C, H, W) float logits (f32 or bf16).
    target_nhw: (N, H, W) integer class labels in [0, C).
    """
    N, C, H, W = x_nchw.shape
    HW = H * W
    M = N * HW

    if isinstance(alpha, (float, int)):
        alpha_vals = (float(alpha), 1.0 - float(alpha))
    else:
        alpha_vals = tuple(float(a) for a in alpha)
    assert C <= len(alpha_vals), "alpha table has fewer entries than classes"

    # ---- dense spatial layout: (N, C, rows, 128) / (N, rows, 128) ----------
    rows_total = pl.cdiv(HW, _LANES)
    hw_pad = rows_total * _LANES

    logits = x_nchw.reshape(N, C, HW)
    tgt = target_nhw.reshape(N, HW)
    if tgt.dtype != jnp.int32:
        tgt = tgt.astype(jnp.int32)
    if hw_pad != HW:
        # One HBM copy, only when H*W is not a multiple of 128.  Zero-padded
        # logits stay finite; padded positions are masked in-kernel.
        logits = jnp.pad(logits, ((0, 0), (0, 0), (0, hw_pad - HW)))
        tgt = jnp.pad(tgt, ((0, 0), (0, hw_pad - HW)))
    logits = logits.reshape(N, C, rows_total, _LANES)
    tgt = tgt.reshape(N, rows_total, _LANES)

    # ---- tile picker: fill a per-step HBM byte budget ----------------------
    x_bytes = jnp.dtype(logits.dtype).itemsize
    bytes_per_row = _LANES * (C * x_bytes + 4)          # logits + int32 targets
    budget_rows = max(8, per_step_bytes // bytes_per_row)

    if rows_total <= budget_rows:
        rows_tile = rows_total                           # full spatial extent
        grid_j = 1
        nb_cap = max(1, budget_rows // max(rows_total, 1))
        nb = 1
        for d in range(min(N, nb_cap), 0, -1):           # largest divisor of N
            if N % d == 0:
                nb = d
                break
    else:
        nb = 1
        rows_tile = (budget_rows // 8) * 8               # multiple of 8 sublanes
        grid_j = pl.cdiv(rows_total, rows_tile)

    grid_n = N // nb
    needs_mask = (grid_j * rows_tile * _LANES) != HW

    tile_bytes = nb * rows_tile * bytes_per_row
    vmem_limit = int(min(64 << 20, max(32 << 20, 3 * tile_bytes)))

    kernel = functools.partial(
        _focal_loss_kernel, gamma=float(gamma), alpha_vals=alpha_vals,
        n_classes=C, hw=HW, rows_tile=rows_tile, needs_mask=needs_mask)

    partials = pl.pallas_call(
        kernel,
        out_shape=jax.ShapeDtypeStruct((grid_n, grid_j, 1, 1), jnp.float32),
        grid_spec=pltpu.PrefetchScalarGridSpec(
            num_scalar_prefetch=0,
            grid=(grid_n, grid_j),
            in_specs=[
                pl.BlockSpec((nb, C, rows_tile, _LANES),
                             lambda n, j: (n, 0, j, 0)),
                pl.BlockSpec((nb, rows_tile, _LANES),
                             lambda n, j: (n, j, 0)),
            ],
            out_specs=pl.BlockSpec((1, 1, 1, 1), lambda n, j: (n, j, 0, 0)),
        ),
        compiler_params=pltpu.CompilerParams(
            dimension_semantics=("parallel", "parallel"),
            vmem_limit_bytes=vmem_limit),
    )(logits, tgt)

    total = jnp.sum(partials)
    if size_average:
        return total / jnp.float32(M)
    return total


def _focal_loss_ref(x_nchw, target_nhw, gamma=2.0, alpha=0.25,
                    size_average=True):
    """Pure-JAX reference mirroring the PyTorch forward."""
    N, C, H, W = x_nchw.shape
    logits = jnp.transpose(x_nchw, (0, 2, 3, 1)).reshape(-1, C).astype(jnp.float32)
    t = target_nhw.reshape(-1).astype(jnp.int32)
    logp = jax.nn.log_softmax(logits, axis=1)
    logpt = jnp.take_along_axis(logp, t[:, None], axis=1)[:, 0]
    pt = jnp.exp(logpt)
    if isinstance(alpha, (float, int)):
        alpha_vec = jnp.array([alpha, 1.0 - alpha], dtype=jnp.float32)
    else:
        alpha_vec = jnp.array(alpha, dtype=jnp.float32)
    at = alpha_vec[t]
    loss = -1.0 * (1.0 - pt) ** gamma * logpt * at
    return jnp.mean(loss) if size_average else jnp.sum(loss)


if __name__ == "__main__":
    key = jax.random.PRNGKey(0)
    k1, k2, k3, k4, k5, k6, k7, k8 = jax.random.split(key, 8)

    # 1) Binary (C=2), H*W multiple of 128: free reshape, single tile, nb=2.
    N, C, H, W = 2, 2, 16, 16
    x = jax.random.normal(k1, (N, C, H, W), dtype=jnp.float32)
    target = jax.random.randint(k2, (N, H, W), 0, C, dtype=jnp.int32)
    out = jax.block_until_ready(focal_loss(x, target, gamma=2.0, alpha=0.25))
    ref = _focal_loss_ref(x, target, gamma=2.0, alpha=0.25)
    assert jnp.allclose(out, ref, rtol=1e-5, atol=1e-6), (out, ref)

    # 2) H*W not a multiple of 128: lane padding + masked last tile.
    N2, H2, W2 = 2, 15, 15
    x2 = jax.random.normal(k3, (N2, C, H2, W2), dtype=jnp.float32)
    t2 = jax.random.randint(k4, (N2, H2, W2), 0, C, dtype=jnp.int32)
    out2 = jax.block_until_ready(focal_loss(x2, t2, gamma=2.0, alpha=0.25))
    ref2 = _focal_loss_ref(x2, t2, gamma=2.0, alpha=0.25)
    assert jnp.allclose(out2, ref2, rtol=1e-5, atol=1e-6), (out2, ref2)

    # 3) Multi-row-tile path (tiny per-step budget forces grid_j > 1 + masked tail).
    N3, H3, W3 = 1, 40, 40
    x3 = jax.random.normal(k5, (N3, C, H3, W3), dtype=jnp.float32)
    t3 = jax.random.randint(k6, (N3, H3, W3), 0, C, dtype=jnp.int32)
    out3 = jax.block_until_ready(
        focal_loss(x3, t3, per_step_bytes=8 * _LANES * (C * 4 + 4)))
    ref3 = _focal_loss_ref(x3, t3)
    assert jnp.allclose(out3, ref3, rtol=1e-5, atol=1e-6), (out3, ref3)

    # 4) C=4 with a list alpha (general log-softmax path), sum reduction.
    N4, C4 = 2, 4
    alpha4 = [0.1, 0.2, 0.3, 0.4]
    x4 = jax.random.normal(k7, (N4, C4, 16, 16), dtype=jnp.float32)
    t4 = jax.random.randint(k8, (N4, 16, 16), 0, C4, dtype=jnp.int32)
    out4 = jax.block_until_ready(
        focal_loss(x4, t4, alpha=alpha4, size_average=False))
    ref4 = _focal_loss_ref(x4, t4, alpha=alpha4, size_average=False)
    assert jnp.allclose(out4, ref4, rtol=1e-5, atol=1e-5), (out4, ref4)

    print("KERNEL_OK")
</pallas_src>

<mosaic_0001>
module attributes {stable_mosaic.version = 11 : i64} {
  func.func @_focal_loss_kernel(%arg0: i32, %arg1: i32, %arg2: memref<2x2x2x128xf32, #tpu.memory_space<vmem>>, %arg3: memref<2x2x128xi32, #tpu.memory_space<vmem>>, %arg4: memref<1x1x1x1xf32, #tpu.memory_space<vmem>>) attributes {dimension_semantics = [#tpu.dimension_semantics<parallel>, #tpu.dimension_semantics<parallel>], iteration_bounds = array<i64: 1, 1>, scalar_prefetch = 0 : i64, scratch_operands = 0 : i64, tpu.core_type = #tpu.core_type<tc>, window_params = [{transform_indices = @transform_0, window_bounds = array<i64: 2, 2, 2, 128>}, {transform_indices = @transform_1, window_bounds = array<i64: 2, 2, 128>}, {transform_indices = @transform_2, window_bounds = array<i64: 1, 1, 1, 1>}]} {
    %c0 = arith.constant 0 : index
    %c0_0 = arith.constant 0 : index
    %c0_1 = arith.constant 0 : index
    %c0_2 = arith.constant 0 : index
    %0 = vector.load %arg2[%c0, %c0_0, %c0_1, %c0_2] : memref<2x2x2x128xf32, #tpu.memory_space<vmem>>, vector<2x2x2x128xf32>
    %c0_3 = arith.constant 0 : index
    %c0_4 = arith.constant 0 : index
    %c0_5 = arith.constant 0 : index
    %1 = vector.load %arg3[%c0_3, %c0_4, %c0_5] : memref<2x2x128xi32, #tpu.memory_space<vmem>>, vector<2x2x128xi32>
    %2 = vector.extract_strided_slice %0 {offsets = [0, 0, 0, 0], sizes = [2, 1, 2, 128], strides = [1, 1, 1, 1]} : vector<2x2x2x128xf32> to vector<2x1x2x128xf32>
    %3 = vector.shape_cast %2 : vector<2x1x2x128xf32> to vector<2x2x128xf32>
    %4 = vector.extract_strided_slice %0 {offsets = [0, 1, 0, 0], sizes = [2, 1, 2, 128], strides = [1, 1, 1, 1]} : vector<2x2x2x128xf32> to vector<2x1x2x128xf32>
    %5 = vector.shape_cast %4 : vector<2x1x2x128xf32> to vector<2x2x128xf32>
    %c1_i32 = arith.constant 1 : i32
    %6 = vector.broadcast %c1_i32 : i32 to vector<2x2x128xi32>
    %7 = arith.cmpi eq, %1, %6 : vector<2x2x128xi32>
    %8 = arith.select %7, %5, %3 : vector<2x2x128xi1>, vector<2x2x128xf32>
    %9 = arith.select %7, %3, %5 : vector<2x2x128xi1>, vector<2x2x128xf32>
    %10 = arith.subf %8, %9 : vector<2x2x128xf32>
    %11 = math.absf %10 : vector<2x2x128xf32>
    %cst = arith.constant 0.000000e+00 : f32
    %12 = vector.broadcast %cst : f32 to vector<2x2x128xf32>
    %13 = arith.subf %12, %11 : vector<2x2x128xf32>
    %14 = math.exp %13 : vector<2x2x128xf32>
    %cst_6 = arith.constant 0.000000e+00 : f32
    %15 = vector.broadcast %cst_6 : f32 to vector<2x2x128xf32>
    %16 = arith.subf %15, %10 : vector<2x2x128xf32>
    %cst_7 = arith.constant 0.000000e+00 : f32
    %17 = vector.broadcast %cst_7 : f32 to vector<2x2x128xf32>
    %18 = arith.maximumf %16, %17 : vector<2x2x128xf32>
    %cst_8 = arith.constant 1.000000e+00 : f32
    %19 = vector.broadcast %cst_8 : f32 to vector<2x2x128xf32>
    %20 = arith.addf %19, %14 : vector<2x2x128xf32>
    %21 = math.log %20 : vector<2x2x128xf32>
    %22 = arith.addf %18, %21 : vector<2x2x128xf32>
    %cst_9 = arith.constant 0.000000e+00 : f32
    %23 = vector.broadcast %cst_9 : f32 to vector<2x2x128xf32>
    %24 = arith.subf %23, %22 : vector<2x2x128xf32>
    %25 = math.exp %24 : vector<2x2x128xf32>
    %cst_10 = arith.constant 2.500000e-01 : f32
    %26 = vector.broadcast %cst_10 : f32 to vector<2x2x128xf32>
    %c1_i32_11 = arith.constant 1 : i32
    %27 = vector.broadcast %c1_i32_11 : i32 to vector<2x2x128xi32>
    %28 = arith.cmpi eq, %1, %27 : vector<2x2x128xi32>
    %cst_12 = arith.constant 7.500000e-01 : f32
    %29 = vector.broadcast %cst_12 : f32 to vector<2x2x128xf32>
    %30 = arith.select %28, %29, %26 : vector<2x2x128xi1>, vector<2x2x128xf32>
    %cst_13 = arith.constant 1.000000e+00 : f32
    %31 = vector.broadcast %cst_13 : f32 to vector<2x2x128xf32>
    %32 = arith.subf %31, %25 : vector<2x2x128xf32>
    %cst_14 = arith.constant 0.000000e+00 : f32
    %33 = vector.broadcast %cst_14 : f32 to vector<2x2x128xf32>
    %34 = arith.maximumf %32, %33 : vector<2x2x128xf32>
    %35 = arith.mulf %34, %34 : vector<2x2x128xf32>
    %36 = arith.mulf %35, %30 : vector<2x2x128xf32>
    %cst_15 = arith.constant 0.000000e+00 : f32
    %37 = vector.broadcast %cst_15 : f32 to vector<2x2x128xf32>
    %38 = arith.subf %37, %36 : vector<2x2x128xf32>
    %39 = arith.mulf %38, %24 : vector<2x2x128xf32>
    %40 = vector.shape_cast %39 : vector<2x2x128xf32> to vector<1x2x2x128xf32>
    %cst_16 = arith.constant dense<0.000000e+00> : vector<1xf32>
    %41 = vector.multi_reduction <add>, %40, %cst_16 [1, 2, 3] : vector<1x2x2x128xf32> to vector<1xf32>
    %42 = vector.shape_cast %41 : vector<1xf32> to vector<1x1x1x1xf32>
    %43 = vector.extract %42[0, 0, 0, 0] : f32 from vector<1x1x1x1xf32>
    %44 = vector.broadcast %43 : f32 to vector<1x1x1x1xf32>
    %c0_17 = arith.constant 0 : index
    %c0_18 = arith.constant 0 : index
    %c0_19 = arith.constant 0 : index
    %c0_20 = arith.constant 0 : index
    %45 = vector.load %arg4[%c0_17, %c0_18, %c0_19, %c0_20] : memref<1x1x1x1xf32, #tpu.memory_space<vmem>>, vector<1x1x1x1xf32>
    tpu.vector_store %arg4[%c0_17, %c0_18, %c0_19, %c0_20], %44 {strides = array<i32>} : memref<1x1x1x1xf32, #tpu.memory_space<vmem>>, vector<1x1x1x1xf32>,
    return
  }
  func.func @transform_0(%arg0: i32, %arg1: i32) -> (i32, i32, i32, i32) {
    %c0_i32 = arith.constant 0 : i32
    %c0_i32_0 = arith.constant 0 : i32
    %c0_i32_1 = arith.constant 0 : i32
    return %arg0, %c0_i32, %arg1, %c0_i32_0 : i32, i32, i32, i32
  }
  func.func @transform_1(%arg0: i32, %arg1: i32) -> (i32, i32, i32) {
    %c0_i32 = arith.constant 0 : i32
    %c0_i32_0 = arith.constant 0 : i32
    return %arg0, %arg1, %c0_i32 : i32, i32, i32
  }
  func.func @transform_2(%arg0: i32, %arg1: i32) -> (i32, i32, i32, i32) {
    %c0_i32 = arith.constant 0 : i32
    %c0_i32_0 = arith.constant 0 : i32
    %c0_i32_1 = arith.constant 0 : i32
    return %arg0, %arg1, %c0_i32, %c0_i32_0 : i32, i32, i32, i32
  }
}

</mosaic_0001>

<llo_original>
// kernel: tpu_custom_call.1
$region0: #{tpu_custom_call.1}
  #allocation0 [shape = 'u32[]', space=smem, size = 0x4, offset = 0x4, fixed_abs, tag = 'smem constant byte address 0x4 - core index']
  #allocation1 [shape = 'u32[144,128]{1,0:T(1,128)}', space=vmem, size = 0x12000, scoped, tag = 'internal scratch']
  %s0 = inlined_call_operand.hbm [shape: f32[2,2,2,128], index: 0, kind: input, shape index: {}]
  %s1 = inlined_call_operand.hbm [shape: s32[2,2,128], index: 1, kind: input, shape index: {}]
  %s2 = inlined_call_operand.hbm [shape: f32[1,1,1,1], index: 2, kind: output, shape index: {}]
  %s3 = sld [smem:[#allocation0]]
  $region26: #{tpu_custom_call.1} parent=0
    _
  %s5 = ssub.s32 1, %s3
  %s6 = scalar_select 0, %s5, %s3
  $region1: #{tpu_custom_call.1} parent=0
    #allocation2 [shape = 'u8[4096]{0}', space=vmem, size = 0x1000, scoped, tag = 'input window, operand 0, single buffered']
    #allocation3 [shape = 's32[1]{0}', space=sflag, size = 0x4, scoped, tag = 'scoped memory for tpu_custom_call.1']
    #allocation4 [shape = 's32[1]{0}', space=sflag, size = 0x4, scoped, tag = 'scoped memory for tpu_custom_call.1']
    #allocation5 [shape = 'u8[2048]{0}', space=vmem, size = 0x800, scoped, tag = 'input window, operand 1, single buffered']
    #allocation6 [shape = 's32[1]{0}', space=sflag, size = 0x4, scoped, tag = 'scoped memory for tpu_custom_call.1']
    #allocation7 [shape = 'u8[512]{0}', space=vmem, size = 0x400, scoped, tag = 'output window, operand 0, single buffered']
    %7 = vsyncpa [#allocation3], 0
    %8 = vsyncpa [#allocation6], 0
    %9 = vsyncpa [#allocation4], 0
    // Predicated region
    $region2: #{tpu_custom_call.1} parent=1 // pred_check
      _
    $region3: #{tpu_custom_call.1} parent=1 // pred_check_branch
      %11 = sbr.rel (0) target = $region5
    $region4: #{tpu_custom_call.1} parent=1 // pred_region
      %s13 = ssub.s32 128, 128
      %14 = vsyncadd [#allocation3], %s13
      %s15 = sshll.u32 [#allocation2], 4
      %s16 = int_to_ptr.vmem [resolvable:$true] %s15
      %21 = dma.hbm_to_vmem [thread:$0]  %s0, 128, %s16, [#allocation3], 32, 32, 2
    $region5: #{tpu_custom_call.1} parent=1 // pred_fallthru
      _
    // Predicated region
    $region6: #{tpu_custom_call.1} parent=1 // pred_check
      _
    $region7: #{tpu_custom_call.1} parent=1 // pred_check_branch
      %23 = sbr.rel (0) target = $region9
    $region8: #{tpu_custom_call.1} parent=1 // pred_region
      %s25 = ssub.s32 64, 64
      %26 = vsyncadd [#allocation6], %s25
      %s27 = sshll.u32 [#allocation5], 4
      %s28 = int_to_ptr.vmem [resolvable:$true] %s27
      %33 = dma.hbm_to_vmem [thread:$0]  %s1, 64, %s28, [#allocation6], 32, 32, 2
    $region9: #{tpu_custom_call.1} parent=1 // pred_fallthru
      _
    // Predicated region
    $region10: #{tpu_custom_call.1} parent=1 // pred_check
      _
    $region11: #{tpu_custom_call.1} parent=1 // pred_check_branch
      %35 = sbr.rel (0) target = $region13
    $region12: #{tpu_custom_call.1} parent=1 // pred_region
      %36 = dma.done [#allocation3], 128
    $region13: #{tpu_custom_call.1} parent=1 // pred_fallthru
      _
    // Predicated region
    $region14: #{tpu_custom_call.1} parent=1 // pred_check
      _
    $region15: #{tpu_custom_call.1} parent=1 // pred_check_branch
      %38 = sbr.rel (0) target = $region17
    $region16: #{tpu_custom_call.1} parent=1 // pred_region
      %39 = dma.done [#allocation6], 64
    $region17: #{tpu_custom_call.1} parent=1 // pred_fallthru
      _
    %v40 = vld [vmem:[#allocation2] sm:$0x3]
    %v41 = vld [vmem:[#allocation2 + $0x2] sm:$0x3]
    %v42 = vld [vmem:[#allocation2 + $0x4] sm:$0x3]
    %v43 = vld [vmem:[#allocation2 + $0x6] sm:$0x3]
    %v44 = vld [vmem:[#allocation5] sm:$0x3]
    %v45 = vld [vmem:[#allocation5 + $0x2] sm:$0x3]
    %vm46 = vcmp.eq.s32.totalorder %v44, 1
    %vm47 = vcmp.eq.s32.totalorder %v45, 1
    %v48 = vsel %vm46, %v41, %v40
    %v49 = vsel %vm47, %v43, %v42
    %v50 = vsel %vm46, %v40, %v41
    %v51 = vsel %vm47, %v42, %v43
    %v52 = vsub.f32 %v48, %v50
    %v53 = vsub.f32 %v49, %v51
    %v54 = vand.u32 2147483647, %v52
    %v55 = vand.u32 2147483647, %v53
    %v56 = vsub.f32 0.0, %v54
    %v57 = vsub.f32 0.0, %v55
    %v58 = vmul.f32 %v56, 1.442695
    %v59 = vpow.pop %v58
    %v60 = vmul.f32 %v57, 1.442695
    %v61 = vpow.pop %v60
    %v62 = vsub.f32 0.0, %v52
    %v63 = vsub.f32 0.0, %v53
    %v64 = vmax.f32 %v62, 0.0
    %v65 = vmax.f32 %v63, 0.0
    %v66 = vadd.f32 %v59, 1.0
    %v67 = vadd.f32 %v61, 1.0
    %v68 = vlog2.pop %v66
    %v69 = vmul.f32 %v68, 0.6931472
    %v70 = vlog2.pop %v67
    %v71 = vmul.f32 %v70, 0.6931472
    %v72 = vadd.f32 %v64, %v69
    %v73 = vadd.f32 %v65, %v71
    %v74 = vsub.f32 0.0, %v72
    %v75 = vsub.f32 0.0, %v73
    %v76 = vmul.f32 %v74, 1.442695
    %v77 = vpow.pop %v76
    %v78 = vmul.f32 %v75, 1.442695
    %v79 = vpow.pop %v78
    %v80 = vsel %vm46, 0.75, 0.25
    %v81 = vsel %vm47, 0.75, 0.25
    %v82 = vsub.f32 1.0, %v77
    %v83 = vsub.f32 1.0, %v79
    %v84 = vmax.f32 %v82, 0.0
    %v85 = vmax.f32 %v83, 0.0
    %v86 = vmul.f32 %v84, %v84
    %v87 = vmul.f32 %v85, %v85
    %v88 = vmul.f32 %v86, %v80
    %v89 = vmul.f32 %v87, %v81
    %v90 = vsub.f32 0.0, %v88
    %v91 = vsub.f32 0.0, %v89
    %v92 = vmul.f32 %v90, %v74
    %v93 = vmul.f32 %v91, %v75
    %vm94 = vcmask 1041408
    %v95 = vsel %vm94, %v92, 0.0
    %v96 = vsel %vm94, %v93, 0.0
    %v97 = vadd.f32 %v95, %v96
    %98 = vadd.xlane.f32.xlu0 %v97
    %v99 = vpop.xlane.xlu0 %98
    %v100 = vrot.slane %v99, 4
    %v101 = vadd.f32 %v99, %v100
    %v102 = vrot.slane %v101, 2
    %v103 = vadd.f32 %v101, %v102
    %v104 = vrot.slane %v103, 1
    %v105 = vadd.f32 %v103, %v104
    %s106 = vtos %v105
    %v107 = vstv %s106
    %vm108 = vcmask 0
    %109 = vst.msk [vmem:[#allocation7] sm:$0x1] %vm108, %v107
    // Predicated region
    $region18: #{tpu_custom_call.1} parent=1 // pred_check
      _
    $region19: #{tpu_custom_call.1} parent=1 // pred_check_branch
      %111 = sbr.rel (0) target = $region21
    $region20: #{tpu_custom_call.1} parent=1 // pred_region
      %s113 = ssub.s32 16, 16
      %114 = vsyncadd [#allocation4], %s113
      %s116 = sshll.u32 [#allocation7], 4
      %s117 = int_to_ptr.vmem [resolvable:$true] %s116
      %119 = dma.vmem_to_hbm [thread:$0]  %s117, 16, %s2, [#allocation4]
    $region21: #{tpu_custom_call.1} parent=1 // pred_fallthru
      _
    // Predicated region
    $region22: #{tpu_custom_call.1} parent=1 // pred_check
      _
    $region23: #{tpu_custom_call.1} parent=1 // pred_check_branch
      %121 = sbr.rel (0) target = $region25
    $region24: #{tpu_custom_call.1} parent=1 // pred_region
      %122 = dma.done [#allocation4], 16
    $region25: #{tpu_custom_call.1} parent=1 // pred_fallthru
      _
    %123 = vsyncpa [#allocation3], 1
    %124 = vsyncpa [#allocation6], 1
    %125 = vsyncpa [#allocation4], 1

</llo_original>
